<compile_context>
chip_gen: v5e
topology: v5e:2x2
jax: 0.10.0
libtpu: 0.0.40
codegen_flags: <defaults>
</compile_context>

<pallas_src>
import jax
import jax.numpy as jnp
from jax.experimental import pallas as pl
from jax.experimental.pallas import tpu as pltpu


def _state_prediction_kernel(utte_ref, gat_ref, wg1t_ref, wg2t_ref, bg_ref,
                             wc_ref, bc_ref, out_ref):
    gat = gat_ref[...]                          # [TB, S, H] f32
    utte = utte_ref[...]                        # [TB, H]    f32
    TB, S, H = gat.shape

    # Gate pre-activation:
    #   cat([clss, gat]) @ W_g^T == utte @ Wg1^T (per batch row, shared over S)
    #                              + gat @ Wg2^T
    # Weights arrive pre-transposed ([H_in, H_out]) and bf16; accumulate in f32.
    z_utte = jnp.dot(utte.astype(jnp.bfloat16), wg1t_ref[...],
                     preferred_element_type=jnp.float32)            # [TB, H]
    gat2 = gat.reshape(TB * S, H)                                    # collapse B,S
    z_gat = jnp.dot(gat2.astype(jnp.bfloat16), wg2t_ref[...],
                    preferred_element_type=jnp.float32)              # [TB*S, H]
    z = (z_gat.reshape(TB, S, H)
         + z_utte[:, None, :]
         + bg_ref[...][None, :, :])                                  # [TB, S, H]
    g_st = jax.nn.sigmoid(z)

    # hidden = clss*g + gat*(1-g) == gat + g*(utte - gat); no [TB,S,H] clss buffer.
    hidden = gat + g_st * (utte[:, None, :] - gat)                   # [TB, S, H]

    # clsf_update: Linear(H -> 1). N=1 matmul would waste the MXU -> VPU + lane reduce.
    # Dropout is identity (eval mode).
    logit = jnp.sum(hidden * wc_ref[...][None, :, :], axis=-1) + bc_ref[...]
    out_ref[...] = jax.nn.sigmoid(logit)                             # [TB, S]


def _pick_batch_tile(batch, slots, target_rows=512):
    """Batch tile so TB*S ~ target rows per MXU pass; must divide batch evenly."""
    tb = max(1, min(batch, max(1, target_rows // max(slots, 1))))
    while batch % tb != 0:
        tb -= 1
    return tb


def state_prediction(utte_cls, gat_output, w_g, b_g, w_c, b_c):
    """utte_cls: [B, H] f32, gat_output: [B, S, H] f32.
       Torch Linear convention: w_g: [H, 2H], b_g: [H], w_c: [1, H], b_c: [1]."""
    B, H = utte_cls.shape
    _, S, _ = gat_output.shape

    # Split / transpose once in the XLA wrapper so the kernel sees [K, N] weights,
    # and pre-cast the matmul weights to bf16 (f32 accumulation inside the kernel).
    wg1_t = w_g[:, :H].T.astype(jnp.bfloat16)    # acts on utte/clss   -> [H, H]
    wg2_t = w_g[:, H:].T.astype(jnp.bfloat16)    # acts on gat_output  -> [H, H]
    bg2d = b_g.reshape(1, H).astype(jnp.float32)
    wc2d = w_c.reshape(1, H).astype(jnp.float32)
    bc2d = b_c.reshape(1, 1).astype(jnp.float32)

    tb = _pick_batch_tile(B, S)
    grid = (B // tb,)

    out = pl.pallas_call(
        _state_prediction_kernel,
        out_shape=jax.ShapeDtypeStruct((B, S), jnp.float32),
        grid_spec=pltpu.PrefetchScalarGridSpec(
            num_scalar_prefetch=0,
            grid=grid,
            in_specs=[
                pl.BlockSpec((tb, H), lambda i: (i, 0)),        # utte_cls tile
                pl.BlockSpec((tb, S, H), lambda i: (i, 0, 0)),  # gat_output tile
                pl.BlockSpec((H, H), lambda i: (0, 0)),         # wg1_t (resident)
                pl.BlockSpec((H, H), lambda i: (0, 0)),         # wg2_t (resident)
                pl.BlockSpec((1, H), lambda i: (0, 0)),         # b_g
                pl.BlockSpec((1, H), lambda i: (0, 0)),         # w_c
                pl.BlockSpec((1, 1), lambda i: (0, 0)),         # b_c
            ],
            out_specs=pl.BlockSpec((tb, S), lambda i: (i, 0)),
        ),
        compiler_params=pltpu.CompilerParams(
            dimension_semantics=("parallel",)),
    )(utte_cls, gat_output, wg1_t, wg2_t, bg2d, wc2d, bc2d)

    # Match torch's .squeeze(): drop all size-1 dims of the [B, S] result.
    return jnp.squeeze(out)


def state_prediction_ref(utte_cls, gat_output, w_g, b_g, w_c, b_c):
    B, H = utte_cls.shape
    S = gat_output.shape[1]
    clss = jnp.broadcast_to(utte_cls[:, None, :], (B, S, H))
    cat = jnp.concatenate([clss, gat_output], axis=-1)
    g_st = jax.nn.sigmoid(cat @ w_g.T + b_g)
    hidden = clss * g_st + gat_output * (1.0 - g_st)
    logit = hidden @ w_c.T + b_c
    return jnp.squeeze(jax.nn.sigmoid(logit))


if __name__ == "__main__":
    B, S, H = 2, 8, 32  # batch, slot_num, hidden_size
    key = jax.random.PRNGKey(0)
    k1, k2, k3, k4, k5, k6 = jax.random.split(key, 6)

    utte_cls = jax.random.normal(k1, (B, H), dtype=jnp.float32)
    gat_output = jax.random.normal(k2, (B, S, H), dtype=jnp.float32)

    # Deterministic parameter init (uniform, matching nn.Linear fan-in scaling).
    w_g = jax.random.uniform(k3, (H, 2 * H), jnp.float32, -1.0, 1.0) / jnp.sqrt(2.0 * H)
    b_g = jax.random.uniform(k4, (H,), jnp.float32, -1.0, 1.0) / jnp.sqrt(2.0 * H)
    w_c = jax.random.uniform(k5, (1, H), jnp.float32, -1.0, 1.0) / jnp.sqrt(1.0 * H)
    b_c = jax.random.uniform(k6, (1,), jnp.float32, -1.0, 1.0) / jnp.sqrt(1.0 * H)

    out = state_prediction(utte_cls, gat_output, w_g, b_g, w_c, b_c)
    out = jax.block_until_ready(out)

    ref = state_prediction_ref(utte_cls, gat_output, w_g, b_g, w_c, b_c)
    assert out.shape == ref.shape, (out.shape, ref.shape)
    # bf16 MXU operands (f32 accumulation) -> relaxed tolerance vs. f32 reference.
    assert jnp.allclose(out, ref, atol=1e-2, rtol=1e-2), (out, ref)

    print("KERNEL_OK")
</pallas_src>

<mosaic_0001>
module attributes {stable_mosaic.version = 11 : i64} {
  func.func @_state_prediction_kernel(%arg0: i32, %arg1: memref<2x32xf32, #tpu.memory_space<vmem>>, %arg2: memref<2x8x32xf32, #tpu.memory_space<vmem>>, %arg3: memref<32x32xbf16, #tpu.memory_space<vmem>>, %arg4: memref<32x32xbf16, #tpu.memory_space<vmem>>, %arg5: memref<1x32xf32, #tpu.memory_space<vmem>>, %arg6: memref<1x32xf32, #tpu.memory_space<vmem>>, %arg7: memref<1x1xf32, #tpu.memory_space<vmem>>, %arg8: memref<2x8xf32, #tpu.memory_space<vmem>>) attributes {dimension_semantics = [#tpu.dimension_semantics<parallel>], iteration_bounds = array<i64: 1>, scalar_prefetch = 0 : i64, scratch_operands = 0 : i64, tpu.core_type = #tpu.core_type<tc>, window_params = [{transform_indices = @transform_0, window_bounds = array<i64: 2, 32>}, {transform_indices = @transform_1, window_bounds = array<i64: 2, 8, 32>}, {pipeline_mode = #tpu.pipeline_mode<synchronous>, transform_indices = @transform_2, window_bounds = array<i64: 32, 32>}, {pipeline_mode = #tpu.pipeline_mode<synchronous>, transform_indices = @transform_3, window_bounds = array<i64: 32, 32>}, {pipeline_mode = #tpu.pipeline_mode<synchronous>, transform_indices = @transform_4, window_bounds = array<i64: 1, 32>}, {pipeline_mode = #tpu.pipeline_mode<synchronous>, transform_indices = @transform_5, window_bounds = array<i64: 1, 32>}, {pipeline_mode = #tpu.pipeline_mode<synchronous>, transform_indices = @transform_6, window_bounds = array<i64: 1, 1>}, {transform_indices = @transform_7, window_bounds = array<i64: 2, 8>}]} {
    %c0 = arith.constant 0 : index
    %c0_0 = arith.constant 0 : index
    %c0_1 = arith.constant 0 : index
    %0 = vector.load %arg2[%c0, %c0_0, %c0_1] : memref<2x8x32xf32, #tpu.memory_space<vmem>>, vector<2x8x32xf32>
    %c0_2 = arith.constant 0 : index
    %c0_3 = arith.constant 0 : index
    %1 = vector.load %arg1[%c0_2, %c0_3] : memref<2x32xf32, #tpu.memory_space<vmem>>, vector<2x32xf32>
    %2 = arith.truncf %1 : vector<2x32xf32> to vector<2x32xbf16>
    %c0_4 = arith.constant 0 : index
    %c0_5 = arith.constant 0 : index
    %3 = vector.load %arg3[%c0_4, %c0_5] : memref<32x32xbf16, #tpu.memory_space<vmem>>, vector<32x32xbf16>
    %cst = arith.constant dense<0.000000e+00> : vector<2x32xf32>
    %4 = tpu.matmul %2, %3, %cst {dimension_numbers = #tpu.dot_dimension_numbers<[1], [0], [0], [1], [0, 0, 1, 1], [], []>} : vector<2x32xbf16>, vector<32x32xbf16>, vector<2x32xf32> -> vector<2x32xf32>
    %5 = vector.shape_cast %0 : vector<2x8x32xf32> to vector<16x32xf32>
    %6 = arith.truncf %5 : vector<16x32xf32> to vector<16x32xbf16>
    %c0_6 = arith.constant 0 : index
    %c0_7 = arith.constant 0 : index
    %7 = vector.load %arg4[%c0_6, %c0_7] : memref<32x32xbf16, #tpu.memory_space<vmem>>, vector<32x32xbf16>
    %cst_8 = arith.constant dense<0.000000e+00> : vector<16x32xf32>
    %8 = tpu.matmul %6, %7, %cst_8 {dimension_numbers = #tpu.dot_dimension_numbers<[1], [0], [0], [1], [0, 0, 1, 1], [], []>} : vector<16x32xbf16>, vector<32x32xbf16>, vector<16x32xf32> -> vector<16x32xf32>
    %9 = vector.shape_cast %8 : vector<16x32xf32> to vector<2x8x32xf32>
    %10 = vector.shape_cast %4 : vector<2x32xf32> to vector<2x1x32xf32>
    %11 = vector.broadcast %10 : vector<2x1x32xf32> to vector<2x8x32xf32>
    %12 = arith.addf %9, %11 : vector<2x8x32xf32>
    %c0_9 = arith.constant 0 : index
    %c0_10 = arith.constant 0 : index
    %13 = vector.load %arg5[%c0_9, %c0_10] : memref<1x32xf32, #tpu.memory_space<vmem>>, vector<1x32xf32>
    %14 = vector.shape_cast %13 : vector<1x32xf32> to vector<1x1x32xf32>
    %15 = vector.broadcast %14 : vector<1x1x32xf32> to vector<2x8x32xf32>
    %16 = arith.addf %12, %15 : vector<2x8x32xf32>
    %17 = arith.negf %16 : vector<2x8x32xf32>
    %18 = math.exp %17 : vector<2x8x32xf32>
    %cst_11 = arith.constant 1.000000e+00 : f32
    %19 = vector.broadcast %cst_11 : f32 to vector<2x8x32xf32>
    %20 = arith.addf %19, %18 : vector<2x8x32xf32>
    %21 = arith.divf %19, %20 : vector<2x8x32xf32>
    %22 = vector.shape_cast %1 : vector<2x32xf32> to vector<2x1x32xf32>
    %23 = vector.broadcast %22 : vector<2x1x32xf32> to vector<2x8x32xf32>
    %24 = arith.subf %23, %0 : vector<2x8x32xf32>
    %25 = arith.mulf %21, %24 : vector<2x8x32xf32>
    %26 = arith.addf %0, %25 : vector<2x8x32xf32>
    %c0_12 = arith.constant 0 : index
    %c0_13 = arith.constant 0 : index
    %27 = vector.load %arg6[%c0_12, %c0_13] : memref<1x32xf32, #tpu.memory_space<vmem>>, vector<1x32xf32>
    %28 = vector.shape_cast %27 : vector<1x32xf32> to vector<1x1x32xf32>
    %29 = vector.broadcast %28 : vector<1x1x32xf32> to vector<2x8x32xf32>
    %30 = arith.mulf %26, %29 : vector<2x8x32xf32>
    %cst_14 = arith.constant dense<0.000000e+00> : vector<2x8xf32>
    %31 = vector.multi_reduction <add>, %30, %cst_14 [2] : vector<2x8x32xf32> to vector<2x8xf32>
    %c0_15 = arith.constant 0 : index
    %c0_16 = arith.constant 0 : index
    %32 = vector.load %arg7[%c0_15, %c0_16] : memref<1x1xf32, #tpu.memory_space<vmem>>, vector<1x1xf32>
    %33 = vector.broadcast %32 : vector<1x1xf32> to vector<2x8xf32>
    %34 = arith.addf %31, %33 : vector<2x8xf32>
    %35 = arith.negf %34 : vector<2x8xf32>
    %36 = math.exp %35 : vector<2x8xf32>
    %cst_17 = arith.constant 1.000000e+00 : f32
    %37 = vector.broadcast %cst_17 : f32 to vector<2x8xf32>
    %38 = arith.addf %37, %36 : vector<2x8xf32>
    %39 = arith.divf %37, %38 : vector<2x8xf32>
    %c0_18 = arith.constant 0 : index
    %c0_19 = arith.constant 0 : index
    %40 = vector.load %arg8[%c0_18, %c0_19] : memref<2x8xf32, #tpu.memory_space<vmem>>, vector<2x8xf32>
    tpu.vector_store %arg8[%c0_18, %c0_19], %39 {strides = array<i32>} : memref<2x8xf32, #tpu.memory_space<vmem>>, vector<2x8xf32>,
    return
  }
  func.func @transform_0(%arg0: i32) -> (i32, i32) {
    %c0_i32 = arith.constant 0 : i32
    %c0_i32_0 = arith.constant 0 : i32
    return %arg0, %c0_i32 : i32, i32
  }
  func.func @transform_1(%arg0: i32) -> (i32, i32, i32) {
    %c0_i32 = arith.constant 0 : i32
    %c0_i32_0 = arith.constant 0 : i32
    %c0_i32_1 = arith.constant 0 : i32
    return %arg0, %c0_i32, %c0_i32_0 : i32, i32, i32
  }
  func.func @transform_2(%arg0: i32) -> (i32, i32) {
    %c0_i32 = arith.constant 0 : i32
    %c0_i32_0 = arith.constant 0 : i32
    %c0_i32_1 = arith.constant 0 : i32
    return %c0_i32, %c0_i32_0 : i32, i32
  }
  func.func @transform_3(%arg0: i32) -> (i32, i32) {
    %c0_i32 = arith.constant 0 : i32
    %c0_i32_0 = arith.constant 0 : i32
    %c0_i32_1 = arith.constant 0 : i32
    return %c0_i32, %c0_i32_0 : i32, i32
  }
  func.func @transform_4(%arg0: i32) -> (i32, i32) {
    %c0_i32 = arith.constant 0 : i32
    %c0_i32_0 = arith.constant 0 : i32
    %c0_i32_1 = arith.constant 0 : i32
    return %c0_i32, %c0_i32_0 : i32, i32
  }
  func.func @transform_5(%arg0: i32) -> (i32, i32) {
    %c0_i32 = arith.constant 0 : i32
    %c0_i32_0 = arith.constant 0 : i32
    %c0_i32_1 = arith.constant 0 : i32
    return %c0_i32, %c0_i32_0 : i32, i32
  }
  func.func @transform_6(%arg0: i32) -> (i32, i32) {
    %c0_i32 = arith.constant 0 : i32
    %c0_i32_0 = arith.constant 0 : i32
    %c0_i32_1 = arith.constant 0 : i32
    return %c0_i32, %c0_i32_0 : i32, i32
  }
  func.func @transform_7(%arg0: i32) -> (i32, i32) {
    %c0_i32 = arith.constant 0 : i32
    %c0_i32_0 = arith.constant 0 : i32
    return %arg0, %c0_i32 : i32, i32
  }
}

</mosaic_0001>

<llo_original>
// kernel: tpu_custom_call.1
$region0: #{tpu_custom_call.1}
  #allocation0 [shape = 'u32[]', space=smem, size = 0x4, offset = 0x4, fixed_abs, tag = 'smem constant byte address 0x4 - core index']
  #allocation1 [shape = 'u32[72,128]{1,0:T(1,128)}', space=vmem, size = 0x9000, scoped, tag = 'internal scratch']
  #allocation2 [shape = 'f32[1,1]{1,0:T(1,128)S(1)}', space=vmem, size = 0x200, scoped, tag = 'scoped memory for tpu_custom_call.1']
  %s0 = inlined_call_operand.vmem [shape: f32[2,32], index: 0, kind: input, shape index: {}]
  %s1 = inlined_call_operand.hbm [shape: f32[2,8,32], index: 1, kind: input, shape index: {}]
  %s2 = inlined_call_operand.hbm [shape: bf16[32,32], index: 2, kind: input, shape index: {}]
  %s3 = inlined_call_operand.hbm [shape: bf16[32,32], index: 3, kind: input, shape index: {}]
  %s4 = inlined_call_operand.vmem [shape: f32[1,32], index: 4, kind: input, shape index: {}]
  %s5 = inlined_call_operand.vmem [shape: f32[1,32], index: 5, kind: input, shape index: {}]
  %s6 = inlined_call_operand.<no memory space> [shape: f32[1,1], index: 6, kind: input, shape index: {}]
  %s7 = inlined_call_operand.hbm [shape: f32[2,8], index: 7, kind: output, shape index: {}]
  %s8 = sld [smem:[#allocation0]]
  $region50: #{tpu_custom_call.1} parent=0
    _
  %s10 = ssub.s32 1, %s8
  %s11 = scalar_select 0, %s10, %s8
  %v12 = vstv %s6
  %13 = vst [vmem:[#allocation2] sm:$0x1] %v12
  $region1: #{tpu_custom_call.1} parent=0
    #allocation3 [shape = 'u8[8192]{0}', space=vmem, size = 0x2000, scoped, tag = 'input window, operand 1, single buffered']
    #allocation4 [shape = 's32[1]{0}', space=sflag, size = 0x4, scoped, tag = 'scoped memory for tpu_custom_call.1']
    #allocation5 [shape = 's32[1]{0}', space=sflag, size = 0x4, scoped, tag = 'scoped memory for tpu_custom_call.1']
    #allocation6 [shape = 'u8[8192]{0}', space=vmem, size = 0x2000, scoped, tag = 'input window, operand 2, single buffered']
    #allocation7 [shape = 's32[1]{0}', space=sflag, size = 0x4, scoped, tag = 'scoped memory for tpu_custom_call.1']
    #allocation8 [shape = 'u8[8192]{0}', space=vmem, size = 0x2000, scoped, tag = 'input window, operand 3, single buffered']
    #allocation9 [shape = 'u8[1024]{0}', space=vmem, size = 0x400, scoped, tag = 'output window, operand 0, single buffered']
    %14 = vsyncpa [#allocation4], 0
    %15 = vsyncpa [#allocation7], 0
    %16 = vsyncpa [#allocation5], 0
    // Predicated region
    $region2: #{tpu_custom_call.1} parent=1 // pred_check
      _
    $region3: #{tpu_custom_call.1} parent=1 // pred_check_branch
      %18 = sbr.rel (0) target = $region5
    $region4: #{tpu_custom_call.1} parent=1 // pred_region
      _
    $region5: #{tpu_custom_call.1} parent=1 // pred_fallthru
      _
    // Predicated region
    $region6: #{tpu_custom_call.1} parent=1 // pred_check
      _
    $region7: #{tpu_custom_call.1} parent=1 // pred_check_branch
      %20 = sbr.rel (0) target = $region9
    $region8: #{tpu_custom_call.1} parent=1 // pred_region
      %22 = vsyncadd [#allocation4], 0
      %s23 = sshll.u32 %s1, 4
      %s24 = int_to_ptr.hbm [resolvable:$true] %s23
      %s25 = sshll.u32 [#allocation3], 4
      %s26 = int_to_ptr.vmem [resolvable:$true] %s25
      %31 = dma.hbm_to_vmem [thread:$0]  %s24, 256, %s26, [#allocation4], 128, 128, 8
    $region9: #{tpu_custom_call.1} parent=1 // pred_fallthru
      _
    // Predicated region
    $region10: #{tpu_custom_call.1} parent=1 // pred_check
      _
    $region11: #{tpu_custom_call.1} parent=1 // pred_check_branch
      %33 = sbr.rel (0) target = $region13
    $region12: #{tpu_custom_call.1} parent=1 // pred_region
      %35 = vsyncadd [#allocation7], 0
      %s36 = sshll.u32 %s2, 4
      %s37 = int_to_ptr.hbm [resolvable:$true] %s36
      %s38 = sshll.u32 [#allocation6], 4
      %s39 = int_to_ptr.vmem [resolvable:$true] %s38
      %44 = dma.hbm_to_vmem [thread:$0]  %s37, 256, %s39, [#allocation7], 64, 64, 4
    $region13: #{tpu_custom_call.1} parent=1 // pred_fallthru
      _
    // Predicated region
    $region14: #{tpu_custom_call.1} parent=1 // pred_check
      _
    $region15: #{tpu_custom_call.1} parent=1 // pred_check_branch
      %46 = sbr.rel (0) target = $region17
    $region16: #{tpu_custom_call.1} parent=1 // pred_region
      %48 = vsyncadd [#allocation7], 0
      %s49 = sshll.u32 %s3, 4
      %s50 = int_to_ptr.hbm [resolvable:$true] %s49
      %s51 = sshll.u32 [#allocation8], 4
      %s52 = int_to_ptr.vmem [resolvable:$true] %s51
      %57 = dma.hbm_to_vmem [thread:$0]  %s50, 256, %s52, [#allocation7], 64, 64, 4
    $region17: #{tpu_custom_call.1} parent=1 // pred_fallthru
      _
    // Predicated region
    $region18: #{tpu_custom_call.1} parent=1 // pred_check
      _
    $region19: #{tpu_custom_call.1} parent=1 // pred_check_branch
      %59 = sbr.rel (0) target = $region21
    $region20: #{tpu_custom_call.1} parent=1 // pred_region
      _
    $region21: #{tpu_custom_call.1} parent=1 // pred_fallthru
      _
    // Predicated region
    $region22: #{tpu_custom_call.1} parent=1 // pred_check
      _
    $region23: #{tpu_custom_call.1} parent=1 // pred_check_branch
      %61 = sbr.rel (0) target = $region25
    $region24: #{tpu_custom_call.1} parent=1 // pred_region
      _
    $region25: #{tpu_custom_call.1} parent=1 // pred_fallthru
      _
    // Predicated region
    $region26: #{tpu_custom_call.1} parent=1 // pred_check
      _
    $region27: #{tpu_custom_call.1} parent=1 // pred_check_branch
      %63 = sbr.rel (0) target = $region29
    $region28: #{tpu_custom_call.1} parent=1 // pred_region
      _
    $region29: #{tpu_custom_call.1} parent=1 // pred_fallthru
      _
    // Predicated region
    $region30: #{tpu_custom_call.1} parent=1 // pred_check
      _
    $region31: #{tpu_custom_call.1} parent=1 // pred_check_branch
      %65 = sbr.rel (0) target = $region33
    $region32: #{tpu_custom_call.1} parent=1 // pred_region
      %67 = dma.done [#allocation4], 256
    $region33: #{tpu_custom_call.1} parent=1 // pred_fallthru
      _
    // Predicated region
    $region34: #{tpu_custom_call.1} parent=1 // pred_check
      _
    $region35: #{tpu_custom_call.1} parent=1 // pred_check_branch
      %69 = sbr.rel (0) target = $region37
    $region36: #{tpu_custom_call.1} parent=1 // pred_region
      %71 = dma.done [#allocation7], 256
    $region37: #{tpu_custom_call.1} parent=1 // pred_fallthru
      _
    // Predicated region
    $region38: #{tpu_custom_call.1} parent=1 // pred_check
      _
    $region39: #{tpu_custom_call.1} parent=1 // pred_check_branch
      %73 = sbr.rel (0) target = $region41
    $region40: #{tpu_custom_call.1} parent=1 // pred_region
      %75 = dma.done [#allocation7], 256
    $region41: #{tpu_custom_call.1} parent=1 // pred_fallthru
      _
    %v77 = vld [vmem:[#allocation3] sm:$0xff]
    %v78 = vld [vmem:[#allocation3 + $0x8] sm:$0xff]
    %v79 = vld [vmem:[%s0] sm:$0x3]
    %v80 = vpack.c.bf16 %v79, %v79
    %v81 = vld [vmem:[#allocation6] sm:$0xf]
    %v82 = vld [vmem:[#allocation6 + $0x4] sm:$0xf]
    %v83 = vld [vmem:[#allocation6 + $0x8] sm:$0xf]
    %v84 = vld [vmem:[#allocation6 + $0xc] sm:$0xf]
    %v89 = vunpack.c.l.b16 %v81
    %v90 = vunpack.c.l.b16 %v82
    %v91 = vunpack.c.l.b16 %v83
    %v92 = vunpack.c.l.b16 %v84
    %v93 = vpack.c.b16 %v90, %v89
    %v94 = vpack.c.b16 %v92, %v91
    %vm97 = vcmask 261120
    %v99 = vsel %vm97, %v80, 0
    %101 = vmatpush.bf16.msra.mxu0 0
    %102 = vmatpush.bf16.msra.mxu0 0
    %103 = vmatpush.bf16.msra.mxu0 0
    %104 = vmatpush.bf16.msra.mxu0 0
    %105 = vmatpush.bf16.msra.mxu0 0
    %106 = vmatpush.bf16.msra.mxu0 0
    %107 = vmatpush.bf16.msra.mxu0 %v94
    %108 = vmatpush.bf16.msra.mxu0 %v93
    %109 = vmatmul.bf16.gmra.mxu0 %v99
    %v110 = vpop.f32.mrf.mxu0
    %v111 = vadd.f32 0.0, %v110
    %v112 = vpop.f32.mrf.mxu0
    %113 = vdwg.mxu0
    %v114 = vpack.c.bf16 %v78, %v77
    %v115 = vld [vmem:[#allocation8] sm:$0xf]
    %v116 = vld [vmem:[#allocation8 + $0x4] sm:$0xf]
    %v117 = vld [vmem:[#allocation8 + $0x8] sm:$0xf]
    %v118 = vld [vmem:[#allocation8 + $0xc] sm:$0xf]
    %v123 = vunpack.c.l.b16 %v115
    %v124 = vunpack.c.l.b16 %v116
    %v125 = vunpack.c.l.b16 %v117
    %v126 = vunpack.c.l.b16 %v118
    %v127 = vpack.c.b16 %v124, %v123
    %v128 = vpack.c.b16 %v126, %v125
    %v132 = vsel %vm97, %v114, 0
    %134 = vmatpush.bf16.msra.mxu0 0
    %135 = vmatpush.bf16.msra.mxu0 0
    %136 = vmatpush.bf16.msra.mxu0 0
    %137 = vmatpush.bf16.msra.mxu0 0
    %138 = vmatpush.bf16.msra.mxu0 0
    %139 = vmatpush.bf16.msra.mxu0 0
    %140 = vmatpush.bf16.msra.mxu0 %v128
    %141 = vmatpush.bf16.msra.mxu0 %v127
    %142 = vmatmul.bf16.gmra.mxu0 %v132
    %v143 = vpop.f32.mrf.mxu0
    %v144 = vadd.f32 0.0, %v143
    %v145 = vpop.f32.mrf.mxu0
    %v146 = vadd.f32 0.0, %v145
    %147 = vdwg.mxu0
    %v149 = vrot.slane %v111, 1
    %v150 = vperm.slane %v111, 0
    %v151 = vperm.slane %v149, 0
    %v154 = vadd.f32 %v144, %v150
    %v155 = vadd.f32 %v146, %v151
    %v156 = vld [vmem:[%s4] sm:$0x1]
    %v158 = vperm.slane %v156, 0
    %v160 = vadd.f32 %v154, %v158
    %v161 = vadd.f32 %v155, %v158
    %v162 = vxor.u32 %v160, 2147483648
    %v163 = vxor.u32 %v161, 2147483648
    %v164 = vmul.f32 %v162, 1.442695
    %v165 = vpow.pop %v164
    %v166 = vmul.f32 %v163, 1.442695
    %v167 = vpow.pop %v166
    %v168 = vadd.f32 %v165, 1.0
    %v169 = vadd.f32 %v167, 1.0
    %v170 = vrcp.pop %v168
    %v171 = vmul.f32 %v168, %v170
    %v172 = vsub.f32 1.0, %v171
    %v173 = vmul.f32 %v170, %v172
    %v174 = vadd.f32 %v170, %v173
    %vm175 = vweird.f32 %v168
    %vm176 = vweird.f32 %v170
    %vm177 = vmor %vm175, %vm176
    %v178 = vsel %vm177, %v170, %v174
    %v179 = vand.u32 2147483647, %v168
    %vm180 = vcmp.eq.f32.partialorder %v179, 8.507059e+37
    %v181 = vand.u32 %v168, 2147483648
    %v182 = vor.u32 1.1754944e-38, %v181
    %v183 = vsel %vm180, %v182, %v178
    %v184 = vmul.f32 1.0, %v183
    %v185 = vrcp.pop %v169
    %v186 = vmul.f32 %v169, %v185
    %v187 = vsub.f32 1.0, %v186
    %v188 = vmul.f32 %v185, %v187
    %v189 = vadd.f32 %v185, %v188
    %vm190 = vweird.f32 %v169
    %vm191 = vweird.f32 %v185
    %vm192 = vmor %vm190, %vm191
    %v193 = vsel %vm192, %v185, %v189
    %v194 = vand.u32 2147483647, %v169
    %vm195 = vcmp.eq.f32.partialorder %v194, 8.507059e+37
    %v196 = vand.u32 %v169, 2147483648
    %v197 = vor.u32 1.1754944e-38, %v196
    %v198 = vsel %vm195, %v197, %v193
    %v199 = vmul.f32 1.0, %v198
    %v201 = vrot.slane %v79, 1
    %v202 = vperm.slane %v79, 0
    %v203 = vperm.slane %v201, 0
    %v206 = vsub.f32 %v202, %v77
    %v207 = vsub.f32 %v203, %v78
    %v208 = vmul.f32 %v184, %v206
    %v209 = vmul.f32 %v199, %v207
    %v210 = vadd.f32 %v77, %v208
    %v211 = vadd.f32 %v78, %v209
    %v212 = vld [vmem:[%s5] sm:$0x1]
    %v214 = vperm.slane %v212, 0
    %v216 = vmul.f32 %v210, %v214
    %v217 = vmul.f32 %v211, %v214
    %v218 = vsel %vm97, %v216, 0.0
    %219 = vadd.xlane.f32.xlu0 %v218
    %v220 = vpop.xlane.xlu0 %219
    %v221 = vsel %vm97, %v217, 0.0
    %222 = vadd.xlane.f32.xlu0 %v221
    %v223 = vpop.xlane.xlu0 %222
    %v224 = vld [vmem:[#allocation2] sm:$0x1]
    %v226 = vperm.slane %v224, 0
    %227 = vset.pattern.permute.xlu0 0
    %228 = vperm.xlu0 %227, %v226
    %v229 = vpop.permute.xlu0 %228
    %v231 = vadd.f32 %v220, %v229
    %v232 = vadd.f32 %v223, %v229
    %v233 = vxor.u32 %v231, 2147483648
    %v234 = vxor.u32 %v232, 2147483648
    %v235 = vmul.f32 %v233, 1.442695
    %v236 = vpow.pop %v235
    %v237 = vmul.f32 %v234, 1.442695
    %v238 = vpow.pop %v237
    %v239 = vadd.f32 %v236, 1.0
    %v240 = vadd.f32 %v238, 1.0
    %v241 = vrcp.pop %v239
    %v242 = vmul.f32 %v239, %v241
    %v243 = vsub.f32 1.0, %v242
    %v244 = vmul.f32 %v241, %v243
    %v245 = vadd.f32 %v241, %v244
    %vm246 = vweird.f32 %v239
    %vm247 = vweird.f32 %v241
    %vm248 = vmor %vm246, %vm247
    %v249 = vsel %vm248, %v241, %v245
    %v250 = vand.u32 2147483647, %v239
    %vm251 = vcmp.eq.f32.partialorder %v250, 8.507059e+37
    %v252 = vand.u32 %v239, 2147483648
    %v253 = vor.u32 1.1754944e-38, %v252
    %v254 = vsel %vm251, %v253, %v249
    %v255 = vmul.f32 1.0, %v254
    %v256 = vrcp.pop %v240
    %v257 = vmul.f32 %v240, %v256
    %v258 = vsub.f32 1.0, %v257
    %v259 = vmul.f32 %v256, %v258
    %v260 = vadd.f32 %v256, %v259
    %vm261 = vweird.f32 %v240
    %vm262 = vweird.f32 %v256
    %vm263 = vmor %vm261, %vm262
    %v264 = vsel %vm263, %v256, %v260
    %v265 = vand.u32 2147483647, %v240
    %vm266 = vcmp.eq.f32.partialorder %v265, 8.507059e+37
    %v267 = vand.u32 %v240, 2147483648
    %v268 = vor.u32 1.1754944e-38, %v267
    %v269 = vsel %vm266, %v268, %v264
    %v270 = vmul.f32 1.0, %v269
    %v273 = vlaneseq
    %v274 = vand.u32 %v273, 127
    %v275 = vperm.slane %v255, %v274
    %v276 = vperm.slane %v270, %v274
    %vm277 = vcmask 1041409
    %v278 = vsel %vm277, %v276, %v275
    %vm280 = vcmask 58368
    %281 = vst.msk [vmem:[#allocation9] sm:$0x3] %vm280, %v278
    // Predicated region
    $region42: #{tpu_custom_call.1} parent=1 // pred_check
      _
    $region43: #{tpu_custom_call.1} parent=1 // pred_check_branch
      %283 = sbr.rel (0) target = $region45
    $region44: #{tpu_custom_call.1} parent=1 // pred_region
      %285 = vsyncadd [#allocation5], 0
      %s287 = sshll.u32 [#allocation9], 4
      %s288 = int_to_ptr.vmem [resolvable:$true] %s287
      %s289 = sshll.u32 %s7, 4
      %s290 = int_to_ptr.hbm [resolvable:$true] %s289
      %292 = dma.vmem_to_hbm [thread:$0]  %s288, 32, %s290, [#allocation5]
    $region45: #{tpu_custom_call.1} parent=1 // pred_fallthru
      _
    // Predicated region
    $region46: #{tpu_custom_call.1} parent=1 // pred_check
      _
    $region47: #{tpu_custom_call.1} parent=1 // pred_check_branch
      %294 = sbr.rel (0) target = $region49
    $region48: #{tpu_custom_call.1} parent=1 // pred_region
      %296 = dma.done [#allocation5], 32
    $region49: #{tpu_custom_call.1} parent=1 // pred_fallthru
      _
    %297 = vsyncpa [#allocation4], 1
    %298 = vsyncpa [#allocation7], 1
    %299 = vsyncpa [#allocation5], 1

</llo_original>
